<compile_context>
chip_gen: v5e
topology: v5e:2x2
jax: 0.10.0
libtpu: 0.0.40
codegen_flags: <defaults>
</compile_context>

<pallas_src>
import functools

import jax
import jax.numpy as jnp
import numpy as np
from jax.experimental import pallas as pl
from jax.experimental.pallas import tpu as pltpu

LANE = 128          # vreg lane width
TR_MAX = 2048       # rows per block: 2048 * 128 * 4 B = 1 MiB per f32 buffer
VMEM_LIMIT = 32 * 1024 * 1024   # raise v5e's 16 MiB default; default on v6e/v7x


def _hinge_math(pred, target, *, loss_bound_l1, pos_label, neg_label, l2):
    """Elementwise hinge-loss math in f32 (mirrors the PyTorch forward)."""
    pred = pred.astype(jnp.float32)        # pred.float()
    target = target.astype(jnp.float32)

    diff = pred - target
    new_t = target
    if loss_bound_l1 > 0.0:
        new_t = jnp.where(diff > loss_bound_l1, pred - loss_bound_l1, new_t)
        new_t = jnp.where(diff < -loss_bound_l1, pred + loss_bound_l1, new_t)

    pos_mask = target >= pos_label
    zero_mask = jnp.logical_and(target < pos_label, target > neg_label)

    loss = pred - new_t                      # new_t is detached (forward only)
    loss = jnp.where(pos_mask, -loss, loss)  # loss[pos_mask] *= -1
    loss = jnp.where(zero_mask, 0.0, loss)   # loss[zero_mask] *= 0
    loss = jnp.where(loss < 0.0, 0.0, loss)  # loss[loss < 0]  *= 0
    if l2:
        loss = loss * loss * 0.5
    return loss, pos_mask


def _hinge_reduce_kernel(*refs, has_weight, need_count, tr, valid_rows,
                         mask_tail, loss_bound_l1, pos_label, neg_label, l2):
    """mean/sum variant: two scalar outputs, no elementwise HBM writeback."""
    if has_weight:
        pred_ref, target_ref, weight_ref, lsum_ref, pcnt_ref, acc_ref, cnt_ref = refs
    else:
        pred_ref, target_ref, lsum_ref, pcnt_ref, acc_ref, cnt_ref = refs
        weight_ref = None

    i = pl.program_id(0)

    @pl.when(i == 0)
    def _():
        acc_ref[...] = jnp.zeros_like(acc_ref)
        cnt_ref[...] = jnp.zeros_like(cnt_ref)

    loss, pos_mask = _hinge_math(
        pred_ref[...], target_ref[...],
        loss_bound_l1=loss_bound_l1, pos_label=pos_label,
        neg_label=neg_label, l2=l2)

    contrib = loss
    if has_weight:
        contrib = contrib * weight_ref[...].astype(jnp.float32)
    cnt = pos_mask.astype(jnp.float32) if need_count else None

    if mask_tail:
        # Only the final grid block is partial; rows >= valid_rows in that block
        # are OOB garbage reads.  (TR,1) sublane iota broadcast across lanes.
        rows = jax.lax.broadcasted_iota(jnp.int32, (tr, 1), 0)
        valid = rows < (valid_rows - i * tr)
        contrib = jnp.where(valid, contrib, 0.0)
        if need_count:
            cnt = jnp.where(valid, cnt, 0.0)

    # (TR,128) -> (1,128): vreg tree adds (VPU) + one sublane reduce (XLU),
    # both free filler slots for a memory-bound stream.  Tiny VMEM accumulator.
    acc_ref[...] += jnp.sum(contrib, axis=0, keepdims=True)
    if need_count:
        cnt_ref[...] += jnp.sum(cnt, axis=0, keepdims=True)

    @pl.when(i == pl.num_programs(0) - 1)
    def _():
        lsum_ref[...] = jnp.sum(acc_ref[...], keepdims=True)
        pcnt_ref[...] = jnp.sum(cnt_ref[...], keepdims=True)


def _hinge_elt_kernel(*refs, has_weight, loss_bound_l1, pos_label, neg_label, l2):
    """'none' variant: writes the (weighted) elementwise loss."""
    if has_weight:
        pred_ref, target_ref, weight_ref, loss_ref = refs
    else:
        pred_ref, target_ref, loss_ref = refs
        weight_ref = None

    loss, _ = _hinge_math(
        pred_ref[...], target_ref[...],
        loss_bound_l1=loss_bound_l1, pos_label=pos_label,
        neg_label=neg_label, l2=l2)
    if has_weight:
        loss = loss * weight_ref[...].astype(jnp.float32)
    loss_ref[...] = loss


def elementwise_hinge_loss(pred, target, weight=None, *,
                           loss_bound_l1=0.0, pos_label=1, neg_label=0,
                           norm_type="positive_label_elt",
                           loss_weight=1.0, reduction="mean", l2=False):
    assert neg_label < pos_label
    assert norm_type in {"positive_label_elt", "positive_loss_elt", "batch"}
    red = "none" if reduction is None else reduction
    assert red in {"none", "mean", "sum"}

    orig_shape = pred.shape
    n = int(pred.size)

    # Flatten to a lane-dense (R, 128) slab in the native dtype.
    R = pl.cdiv(n, LANE)
    lane_pad = R * LANE - n     # 0 for the common n % 128 == 0 case (free reshape)

    def _as_slab(x):
        x = jnp.ravel(x)
        if lane_pad:
            x = jnp.pad(x, (0, lane_pad))   # zero padding is loss-neutral
        return x.reshape(R, LANE)

    inputs = [_as_slab(pred), _as_slab(target)]
    has_weight = weight is not None
    if has_weight:
        inputs.append(_as_slab(weight))

    TR = R if R <= TR_MAX else TR_MAX
    grid = (pl.cdiv(R, TR),)
    mask_tail = (R % TR) != 0
    in_specs = [pl.BlockSpec((TR, LANE), lambda i: (i, 0))] * len(inputs)

    math_kw = dict(loss_bound_l1=float(loss_bound_l1),
                   pos_label=float(pos_label),
                   neg_label=float(neg_label),
                   l2=bool(l2))

    if red in ("mean", "sum"):
        # positive-label count only needed for mean + positive_label_elt norm.
        need_count = (red == "mean" and norm_type == "positive_label_elt")
        kernel = functools.partial(
            _hinge_reduce_kernel, has_weight=has_weight, need_count=need_count,
            tr=TR, valid_rows=R, mask_tail=mask_tail, **math_kw)
        lsum, pcnt = pl.pallas_call(
            kernel,
            grid=grid,
            in_specs=in_specs,
            out_specs=[pl.BlockSpec((1, 1), lambda i: (0, 0)),
                       pl.BlockSpec((1, 1), lambda i: (0, 0))],
            out_shape=[jax.ShapeDtypeStruct((1, 1), jnp.float32),
                       jax.ShapeDtypeStruct((1, 1), jnp.float32)],
            scratch_shapes=[pltpu.VMEM((1, LANE), jnp.float32),
                            pltpu.VMEM((1, LANE), jnp.float32)],
            compiler_params=pltpu.CompilerParams(
                dimension_semantics=("arbitrary",),
                vmem_limit_bytes=VMEM_LIMIT),
        )(*inputs)
        # TODO(synk): on v7x the serial reduction grid could additionally be
        # split across the two TensorCores (per-core partial sums) for up to ~2x.

        # _get_norm
        if red == "mean":
            if norm_type == "positive_label_elt":
                norm = jnp.maximum(pcnt[0, 0], 1.0)
            elif norm_type == "positive_loss_elt":
                # after the loss<0 clamp every element satisfies loss >= 0, so
                # the reference count equals the number of (unpadded) elements.
                norm = jnp.float32(max(n, 1))
            else:  # "batch"
                norm = jnp.float32(orig_shape[0])
            out = lsum[0, 0] / norm
        else:
            out = lsum[0, 0]
    else:  # 'none': elementwise (weighted) loss, written directly by the kernel
        kernel = functools.partial(_hinge_elt_kernel, has_weight=has_weight,
                                   **math_kw)
        loss2d = pl.pallas_call(
            kernel,
            grid=grid,
            in_specs=in_specs,
            out_specs=pl.BlockSpec((TR, LANE), lambda i: (i, 0)),
            out_shape=jax.ShapeDtypeStruct((R, LANE), jnp.float32),
            compiler_params=pltpu.CompilerParams(
                dimension_semantics=("parallel",),
                vmem_limit_bytes=VMEM_LIMIT),
        )(*inputs)
        out = loss2d.reshape(-1)[:n].reshape(orig_shape)

    # TODO(synk): hard_neg_mining_cfg (LossHardNegativeMining) path not implemented.
    return loss_weight * out


def _reference(pred, target, weight=None, *, loss_bound_l1=0.0, pos_label=1,
               neg_label=0, norm_type="positive_label_elt", loss_weight=1.0,
               reduction="mean", l2=False):
    loss, pos = _hinge_math(pred, target,
                            loss_bound_l1=float(loss_bound_l1),
                            pos_label=float(pos_label),
                            neg_label=float(neg_label), l2=bool(l2))
    wl = loss if weight is None else loss * weight.astype(jnp.float32)
    if norm_type == "positive_label_elt":
        norm = jnp.maximum(jnp.sum(pos.astype(jnp.float32)), 1.0)
    elif norm_type == "positive_loss_elt":
        norm = jnp.float32(loss.size)
    else:
        norm = jnp.float32(loss.shape[0])
    red = "none" if reduction is None else reduction
    if red == "mean":
        out = jnp.sum(wl) / norm
    elif red == "sum":
        out = jnp.sum(wl)
    else:
        out = wl
    return loss_weight * out


if __name__ == "__main__":
    key = jax.random.PRNGKey(0)
    k1, k2, k3, k4, k5 = jax.random.split(key, 5)

    # 1) basic: f32, reduction='mean', no weight, single block.
    shape = (2, 4, 16, 16)
    pred = jax.random.normal(k1, shape, dtype=jnp.float32)
    # target values in {0.0, 0.5, 1.0}: exercises neg / ignore / pos branches
    target = jax.random.randint(k2, shape, 0, 3).astype(jnp.float32) * 0.5
    out = jax.block_until_ready(elementwise_hinge_loss(pred, target, reduction="mean"))
    ref = jax.block_until_ready(_reference(pred, target, reduction="mean"))
    np.testing.assert_allclose(np.asarray(out), np.asarray(ref), rtol=1e-5, atol=1e-6)

    # 2) multi-block grid + ragged row tail + bf16 pred + weight + l1 bound + l2.
    shape2 = (2, 8, 129, 128)   # numel = 264192 -> R = 2064 > TR_MAX (partial block)
    pred2 = jax.random.normal(k3, shape2, dtype=jnp.bfloat16)
    target2 = jax.random.randint(k4, shape2, 0, 3).astype(jnp.float32) * 0.5
    weight2 = jax.random.uniform(k5, shape2, dtype=jnp.float32)
    kw2 = dict(loss_bound_l1=0.25, l2=True, reduction="mean", loss_weight=2.0)
    out2 = jax.block_until_ready(elementwise_hinge_loss(pred2, target2, weight2, **kw2))
    ref2 = jax.block_until_ready(_reference(pred2, target2, weight2, **kw2))
    np.testing.assert_allclose(np.asarray(out2), np.asarray(ref2), rtol=1e-4, atol=1e-5)

    # 3) reduction='none' with weight (weighted elementwise loss from the kernel).
    w3 = jnp.abs(pred)
    out3 = jax.block_until_ready(
        elementwise_hinge_loss(pred, target, weight=w3, reduction="none"))
    ref3 = jax.block_until_ready(_reference(pred, target, weight=w3, reduction="none"))
    np.testing.assert_allclose(np.asarray(out3), np.asarray(ref3), rtol=1e-5, atol=1e-6)

    # 4) reduction='sum' (count stream compiled out).
    out4 = jax.block_until_ready(elementwise_hinge_loss(pred, target, reduction="sum"))
    ref4 = jax.block_until_ready(_reference(pred, target, reduction="sum"))
    np.testing.assert_allclose(np.asarray(out4), np.asarray(ref4), rtol=1e-5, atol=1e-5)

    # 5) reduction='none' on a multi-block grid with a ragged row tail.
    out5 = jax.block_until_ready(
        elementwise_hinge_loss(pred2, target2, reduction="none", l2=True))
    ref5 = jax.block_until_ready(
        _reference(pred2, target2, reduction="none", l2=True))
    np.testing.assert_allclose(np.asarray(out5), np.asarray(ref5), rtol=1e-4, atol=1e-6)

    print("KERNEL_OK")
</pallas_src>

<mosaic_0001>
module attributes {stable_mosaic.version = 11 : i64} {
  func.func @_hinge_reduce_kernel(%arg0: i32, %arg1: memref<16x128xf32, #tpu.memory_space<vmem>>, %arg2: memref<16x128xf32, #tpu.memory_space<vmem>>, %arg3: memref<1x1xf32, #tpu.memory_space<vmem>>, %arg4: memref<1x1xf32, #tpu.memory_space<vmem>>, %arg5: memref<1x128xf32, #tpu.memory_space<vmem>>, %arg6: memref<1x128xf32, #tpu.memory_space<vmem>>) attributes {dimension_semantics = [#tpu.dimension_semantics<arbitrary>], iteration_bounds = array<i64: 1>, scalar_prefetch = 0 : i64, scratch_operands = 2 : i64, tpu.core_type = #tpu.core_type<tc>, window_params = [{transform_indices = @transform_0, window_bounds = array<i64: 16, 128>}, {transform_indices = @transform_1, window_bounds = array<i64: 16, 128>}, {pipeline_mode = #tpu.pipeline_mode<synchronous>, transform_indices = @transform_2, window_bounds = array<i64: 1, 1>}, {pipeline_mode = #tpu.pipeline_mode<synchronous>, transform_indices = @transform_3, window_bounds = array<i64: 1, 1>}]} {
    %c0_i32 = arith.constant 0 : i32
    %0 = arith.cmpi eq, %arg0, %c0_i32 : i32
    %1 = arith.extui %0 : i1 to i32
    %c0_i32_0 = arith.constant 0 : i32
    %2 = arith.cmpi ne, %1, %c0_i32_0 : i32
    scf.if %2 {
      %cst_22 = arith.constant 0.000000e+00 : f32
      %37 = vector.broadcast %cst_22 : f32 to vector<1x128xf32>
      %c0_23 = arith.constant 0 : index
      %c0_24 = arith.constant 0 : index
      %38 = vector.load %arg5[%c0_23, %c0_24] : memref<1x128xf32, #tpu.memory_space<vmem>>, vector<1x128xf32>
      tpu.vector_store %arg5[%c0_23, %c0_24], %37 {strides = array<i32>} : memref<1x128xf32, #tpu.memory_space<vmem>>, vector<1x128xf32>,
      %cst_25 = arith.constant 0.000000e+00 : f32
      %39 = vector.broadcast %cst_25 : f32 to vector<1x128xf32>
      %c0_26 = arith.constant 0 : index
      %c0_27 = arith.constant 0 : index
      %40 = vector.load %arg6[%c0_26, %c0_27] : memref<1x128xf32, #tpu.memory_space<vmem>>, vector<1x128xf32>
      tpu.vector_store %arg6[%c0_26, %c0_27], %39 {strides = array<i32>} : memref<1x128xf32, #tpu.memory_space<vmem>>, vector<1x128xf32>,
    } else {
    }
    %c0 = arith.constant 0 : index
    %c0_1 = arith.constant 0 : index
    %3 = vector.load %arg1[%c0, %c0_1] : memref<16x128xf32, #tpu.memory_space<vmem>>, vector<16x128xf32>
    %c0_2 = arith.constant 0 : index
    %c0_3 = arith.constant 0 : index
    %4 = vector.load %arg2[%c0_2, %c0_3] : memref<16x128xf32, #tpu.memory_space<vmem>>, vector<16x128xf32>
    %cst = arith.constant 1.000000e+00 : f32
    %5 = vector.broadcast %cst : f32 to vector<16x128xf32>
    %6 = arith.cmpf oge, %4, %5 : vector<16x128xf32>
    %cst_4 = arith.constant 1.000000e+00 : f32
    %7 = vector.broadcast %cst_4 : f32 to vector<16x128xf32>
    %8 = arith.cmpf olt, %4, %7 : vector<16x128xf32>
    %cst_5 = arith.constant 0.000000e+00 : f32
    %9 = vector.broadcast %cst_5 : f32 to vector<16x128xf32>
    %10 = arith.cmpf ogt, %4, %9 : vector<16x128xf32>
    %11 = arith.andi %8, %10 : vector<16x128xi1>
    %12 = arith.subf %3, %4 : vector<16x128xf32>
    %cst_6 = arith.constant 0.000000e+00 : f32
    %13 = vector.broadcast %cst_6 : f32 to vector<16x128xf32>
    %14 = arith.subf %13, %12 : vector<16x128xf32>
    %15 = arith.select %6, %14, %12 : vector<16x128xi1>, vector<16x128xf32>
    %cst_7 = arith.constant 0.000000e+00 : f32
    %16 = vector.broadcast %cst_7 : f32 to vector<16x128xf32>
    %17 = arith.select %11, %16, %15 : vector<16x128xi1>, vector<16x128xf32>
    %cst_8 = arith.constant 0.000000e+00 : f32
    %18 = vector.broadcast %cst_8 : f32 to vector<16x128xf32>
    %19 = arith.cmpf olt, %17, %18 : vector<16x128xf32>
    %cst_9 = arith.constant 0.000000e+00 : f32
    %20 = vector.broadcast %cst_9 : f32 to vector<16x128xf32>
    %21 = arith.select %19, %20, %17 : vector<16x128xi1>, vector<16x128xf32>
    %22 = arith.extui %6 : vector<16x128xi1> to vector<16x128xi32>
    %23 = arith.sitofp %22 : vector<16x128xi32> to vector<16x128xf32>
    %c0_10 = arith.constant 0 : index
    %c0_11 = arith.constant 0 : index
    %24 = vector.load %arg5[%c0_10, %c0_11] : memref<1x128xf32, #tpu.memory_space<vmem>>, vector<1x128xf32>
    %cst_12 = arith.constant dense<0.000000e+00> : vector<128xf32>
    %25 = vector.multi_reduction <add>, %21, %cst_12 [0] : vector<16x128xf32> to vector<128xf32>
    %26 = vector.shape_cast %25 : vector<128xf32> to vector<1x128xf32>
    %27 = arith.addf %24, %26 : vector<1x128xf32>
    %c0_13 = arith.constant 0 : index
    %c0_14 = arith.constant 0 : index
    %28 = vector.load %arg5[%c0_13, %c0_14] : memref<1x128xf32, #tpu.memory_space<vmem>>, vector<1x128xf32>
    tpu.vector_store %arg5[%c0_13, %c0_14], %27 {strides = array<i32>} : memref<1x128xf32, #tpu.memory_space<vmem>>, vector<1x128xf32>,
    %c0_15 = arith.constant 0 : index
    %c0_16 = arith.constant 0 : index
    %29 = vector.load %arg6[%c0_15, %c0_16] : memref<1x128xf32, #tpu.memory_space<vmem>>, vector<1x128xf32>
    %cst_17 = arith.constant dense<0.000000e+00> : vector<128xf32>
    %30 = vector.multi_reduction <add>, %23, %cst_17 [0] : vector<16x128xf32> to vector<128xf32>
    %31 = vector.shape_cast %30 : vector<128xf32> to vector<1x128xf32>
    %32 = arith.addf %29, %31 : vector<1x128xf32>
    %c0_18 = arith.constant 0 : index
    %c0_19 = arith.constant 0 : index
    %33 = vector.load %arg6[%c0_18, %c0_19] : memref<1x128xf32, #tpu.memory_space<vmem>>, vector<1x128xf32>
    tpu.vector_store %arg6[%c0_18, %c0_19], %32 {strides = array<i32>} : memref<1x128xf32, #tpu.memory_space<vmem>>, vector<1x128xf32>,
    %c0_i32_20 = arith.constant 0 : i32
    %34 = arith.cmpi eq, %arg0, %c0_i32_20 : i32
    %35 = arith.extui %34 : i1 to i32
    %c0_i32_21 = arith.constant 0 : i32
    %36 = arith.cmpi ne, %35, %c0_i32_21 : i32
    scf.if %36 {
      %c0_22 = arith.constant 0 : index
      %c0_23 = arith.constant 0 : index
      %37 = vector.load %arg5[%c0_22, %c0_23] : memref<1x128xf32, #tpu.memory_space<vmem>>, vector<1x128xf32>
      %38 = vector.shape_cast %37 : vector<1x128xf32> to vector<1x1x128xf32>
      %cst_24 = arith.constant dense<0.000000e+00> : vector<1xf32>
      %39 = vector.multi_reduction <add>, %38, %cst_24 [1, 2] : vector<1x1x128xf32> to vector<1xf32>
      %40 = vector.shape_cast %39 : vector<1xf32> to vector<1x1x1xf32>
      %41 = vector.extract %40[0, 0, 0] : f32 from vector<1x1x1xf32>
      %42 = vector.broadcast %41 : f32 to vector<1x1xf32>
      %c0_25 = arith.constant 0 : index
      %c0_26 = arith.constant 0 : index
      %43 = vector.load %arg3[%c0_25, %c0_26] : memref<1x1xf32, #tpu.memory_space<vmem>>, vector<1x1xf32>
      tpu.vector_store %arg3[%c0_25, %c0_26], %42 {strides = array<i32>} : memref<1x1xf32, #tpu.memory_space<vmem>>, vector<1x1xf32>,
      %c0_27 = arith.constant 0 : index
      %c0_28 = arith.constant 0 : index
      %44 = vector.load %arg6[%c0_27, %c0_28] : memref<1x128xf32, #tpu.memory_space<vmem>>, vector<1x128xf32>
      %45 = vector.shape_cast %44 : vector<1x128xf32> to vector<1x1x128xf32>
      %cst_29 = arith.constant dense<0.000000e+00> : vector<1xf32>
      %46 = vector.multi_reduction <add>, %45, %cst_29 [1, 2] : vector<1x1x128xf32> to vector<1xf32>
      %47 = vector.shape_cast %46 : vector<1xf32> to vector<1x1x1xf32>
      %48 = vector.extract %47[0, 0, 0] : f32 from vector<1x1x1xf32>
      %49 = vector.broadcast %48 : f32 to vector<1x1xf32>
      %c0_30 = arith.constant 0 : index
      %c0_31 = arith.constant 0 : index
      %50 = vector.load %arg4[%c0_30, %c0_31] : memref<1x1xf32, #tpu.memory_space<vmem>>, vector<1x1xf32>
      tpu.vector_store %arg4[%c0_30, %c0_31], %49 {strides = array<i32>} : memref<1x1xf32, #tpu.memory_space<vmem>>, vector<1x1xf32>,
    } else {
    }
    return
  }
  func.func @transform_0(%arg0: i32) -> (i32, i32) {
    %c0_i32 = arith.constant 0 : i32
    %c0_i32_0 = arith.constant 0 : i32
    return %arg0, %c0_i32 : i32, i32
  }
  func.func @transform_1(%arg0: i32) -> (i32, i32) {
    %c0_i32 = arith.constant 0 : i32
    %c0_i32_0 = arith.constant 0 : i32
    return %arg0, %c0_i32 : i32, i32
  }
  func.func @transform_2(%arg0: i32) -> (i32, i32) {
    %c0_i32 = arith.constant 0 : i32
    %c0_i32_0 = arith.constant 0 : i32
    %c0_i32_1 = arith.constant 0 : i32
    return %c0_i32, %c0_i32_0 : i32, i32
  }
  func.func @transform_3(%arg0: i32) -> (i32, i32) {
    %c0_i32 = arith.constant 0 : i32
    %c0_i32_0 = arith.constant 0 : i32
    %c0_i32_1 = arith.constant 0 : i32
    return %c0_i32, %c0_i32_0 : i32, i32
  }
}

</mosaic_0001>

<llo_original>
// kernel: tpu_custom_call.1
$region0: #{tpu_custom_call.1}
  #allocation0 [shape = 'u32[]', space=smem, size = 0x4, offset = 0x4, fixed_abs, tag = 'smem constant byte address 0x4 - core index']
  #allocation1 [shape = 'u32[72,128]{1,0:T(1,128)}', space=vmem, size = 0x9000, scoped, tag = 'internal scratch']
  #allocation2 [shape = 'f32[1,128]{1,0:T(1,128)}', space=vmem, size = 0x200, scoped, tag = 'scratch operand']
  #allocation3 [shape = 'f32[1,128]{1,0:T(1,128)}', space=vmem, size = 0x200, scoped, tag = 'scratch operand']
  %s0 = inlined_call_operand.hbm [shape: f32[16,128], index: 0, kind: input, shape index: {}]
  %s1 = inlined_call_operand.hbm [shape: f32[16,128], index: 1, kind: input, shape index: {}]
  %s2 = inlined_call_operand.hbm [shape: f32[1,1], index: 2, kind: output, shape index: {0}]
  %s3 = inlined_call_operand.hbm [shape: f32[1,1], index: 3, kind: output, shape index: {1}]
  %4 = xla_tuple %s2, %s3
  %s5 = sld [smem:[#allocation0]]
  $region42: #{tpu_custom_call.1} parent=0
    _
  %s7 = ssub.s32 1, %s5
  %s8 = scalar_select 0, %s7, %s5
  $region1: #{tpu_custom_call.1} parent=0
    #allocation4 [shape = 'u8[8192]{0}', space=vmem, size = 0x2000, scoped, tag = 'input window, operand 0, single buffered']
    #allocation5 [shape = 's32[1]{0}', space=sflag, size = 0x4, scoped, tag = 'scoped memory for tpu_custom_call.1']
    #allocation6 [shape = 's32[1]{0}', space=sflag, size = 0x4, scoped, tag = 'scoped memory for tpu_custom_call.1']
    #allocation7 [shape = 'u8[8192]{0}', space=vmem, size = 0x2000, scoped, tag = 'input window, operand 1, single buffered']
    #allocation8 [shape = 's32[1]{0}', space=sflag, size = 0x4, scoped, tag = 'scoped memory for tpu_custom_call.1']
    #allocation9 [shape = 'u8[512]{0}', space=vmem, size = 0x400, scoped, tag = 'output window, operand 0, single buffered']
    #allocation10 [shape = 'u8[512]{0}', space=vmem, size = 0x400, scoped, tag = 'output window, operand 1, single buffered']
    #allocation11 [shape = 's32[1]{0}', space=sflag, size = 0x4, scoped, tag = 'scoped memory for tpu_custom_call.1']
    %9 = vsyncpa [#allocation5], 0
    %10 = vsyncpa [#allocation8], 0
    %11 = vsyncpa [#allocation6], 0
    %12 = vsyncpa [#allocation11], 0
    // Predicated region
    $region2: #{tpu_custom_call.1} parent=1 // pred_check
      _
    $region3: #{tpu_custom_call.1} parent=1 // pred_check_branch
      %14 = sbr.rel (0) target = $region5
    $region4: #{tpu_custom_call.1} parent=1 // pred_region
      %16 = vsyncadd [#allocation5], 0
      %s17 = sshll.u32 %s0, 4
      %s18 = int_to_ptr.hbm [resolvable:$true] %s17
      %s19 = sshll.u32 [#allocation4], 4
      %s20 = int_to_ptr.vmem [resolvable:$true] %s19
      %25 = dma.hbm_to_vmem [thread:$0]  %s18, 256, %s20, [#allocation5], 128, 128, 8
    $region5: #{tpu_custom_call.1} parent=1 // pred_fallthru
      _
    // Predicated region
    $region6: #{tpu_custom_call.1} parent=1 // pred_check
      _
    $region7: #{tpu_custom_call.1} parent=1 // pred_check_branch
      %27 = sbr.rel (0) target = $region9
    $region8: #{tpu_custom_call.1} parent=1 // pred_region
      %29 = vsyncadd [#allocation8], 0
      %s30 = sshll.u32 %s1, 4
      %s31 = int_to_ptr.hbm [resolvable:$true] %s30
      %s32 = sshll.u32 [#allocation7], 4
      %s33 = int_to_ptr.vmem [resolvable:$true] %s32
      %38 = dma.hbm_to_vmem [thread:$0]  %s31, 256, %s33, [#allocation8], 128, 128, 8
    $region9: #{tpu_custom_call.1} parent=1 // pred_fallthru
      _
    // Predicated region
    $region10: #{tpu_custom_call.1} parent=1 // pred_check
      _
    $region11: #{tpu_custom_call.1} parent=1 // pred_check_branch
      %40 = sbr.rel (0) target = $region13
    $region12: #{tpu_custom_call.1} parent=1 // pred_region
      %42 = dma.done [#allocation5], 256
    $region13: #{tpu_custom_call.1} parent=1 // pred_fallthru
      _
    // Predicated region
    $region14: #{tpu_custom_call.1} parent=1 // pred_check
      _
    $region15: #{tpu_custom_call.1} parent=1 // pred_check_branch
      %44 = sbr.rel (0) target = $region17
    $region16: #{tpu_custom_call.1} parent=1 // pred_region
      %46 = dma.done [#allocation8], 256
    $region17: #{tpu_custom_call.1} parent=1 // pred_fallthru
      _
    %p47 = scmp.eq.s32.totalorder 0, 0
    // Predicated region
    $region18: #{tpu_custom_call.1} parent=1 // pred_check
      %p48 = pneg %p47
    $region19: #{tpu_custom_call.1} parent=1 // pred_check_branch
      %50 = sbr.rel (%p48) target = $region21
    $region20: #{tpu_custom_call.1} parent=1 // pred_region
      %51 = vst [vmem:[#allocation2] sm:$0x1] 0.0
      %52 = vst [vmem:[#allocation3] sm:$0x1] 0.0
    $region21: #{tpu_custom_call.1} parent=1 // pred_fallthru
      _
    %v53 = vld [vmem:[#allocation4] sm:$0xff]
    %v54 = vld [vmem:[#allocation4 + $0x8] sm:$0xff]
    %v55 = vld [vmem:[#allocation7] sm:$0xff]
    %v56 = vld [vmem:[#allocation7 + $0x8] sm:$0xff]
    %vm57 = vcmp.ge.f32.partialorder %v55, 1.0
    %vm58 = vcmp.ge.f32.partialorder %v56, 1.0
    %vm59 = vcmp.lt.f32.partialorder %v55, 1.0
    %vm60 = vcmp.lt.f32.partialorder %v56, 1.0
    %vm61 = vcmp.gt.f32.partialorder %v55, 0.0
    %vm62 = vcmp.gt.f32.partialorder %v56, 0.0
    %vm63 = vmand %vm59, %vm61
    %vm64 = vmand %vm60, %vm62
    %v65 = vsub.f32 %v53, %v55
    %v66 = vsub.f32 %v54, %v56
    %v67 = vsub.f32 0.0, %v65
    %v68 = vsub.f32 0.0, %v66
    %v69 = vsel %vm57, %v67, %v65
    %v70 = vsel %vm58, %v68, %v66
    %v71 = vsel %vm63, 0.0, %v69
    %v72 = vsel %vm64, 0.0, %v70
    %vm73 = vcmp.lt.f32.partialorder %v71, 0.0
    %vm74 = vcmp.lt.f32.partialorder %v72, 0.0
    %v75 = vsel %vm73, 0.0, %v71
    %v76 = vsel %vm74, 0.0, %v72
    %v77 = vsel %vm57, 1, 0
    %v78 = vsel %vm58, 1, 0
    %v79 = vcvt.s32.f32 %v77
    %v80 = vcvt.s32.f32 %v78
    %v81 = vld [vmem:[#allocation2] sm:$0x1]
    %v82 = vadd.f32 %v75, %v76
    %v83 = vrot.slane %v82, 4
    %v84 = vadd.f32 %v82, %v83
    %v85 = vrot.slane %v84, 2
    %v86 = vadd.f32 %v84, %v85
    %v87 = vrot.slane %v86, 1
    %v88 = vadd.f32 %v86, %v87
    %v89 = vadd.f32 %v81, %v88
    %90 = vst [vmem:[#allocation2] sm:$0x1] %v89
    %v91 = vld [vmem:[#allocation3] sm:$0x1]
    %v92 = vadd.f32 %v79, %v80
    %v93 = vrot.slane %v92, 4
    %v94 = vadd.f32 %v92, %v93
    %v95 = vrot.slane %v94, 2
    %v96 = vadd.f32 %v94, %v95
    %v97 = vrot.slane %v96, 1
    %v98 = vadd.f32 %v96, %v97
    %v99 = vadd.f32 %v91, %v98
    %100 = vst [vmem:[#allocation3] sm:$0x1] %v99
    // Predicated region
    $region22: #{tpu_custom_call.1} parent=1 // pred_check
      %p101 = pneg %p47
    $region23: #{tpu_custom_call.1} parent=1 // pred_check_branch
      %103 = sbr.rel (%p101) target = $region25
    $region24: #{tpu_custom_call.1} parent=1 // pred_region
      %v104 = vld [vmem:[#allocation2] sm:$0x1]
      %vm105 = vcmask 1040384
      %v106 = vsel %vm105, %v104, 0.0
      %107 = vadd.xlane.f32.xlu0 %v106
      %v108 = vpop.xlane.xlu0 %107
      %v109 = vrot.slane %v108, 4
      %v110 = vadd.f32 %v108, %v109
      %v111 = vrot.slane %v110, 2
      %v112 = vadd.f32 %v110, %v111
      %v113 = vrot.slane %v112, 1
      %v114 = vadd.f32 %v112, %v113
      %s115 = vtos %v114
      %v116 = vstv %s115
      %vm117 = vcmask 0
      %118 = vst.msk [vmem:[#allocation9] sm:$0x1] %vm117, %v116
      %v119 = vld [vmem:[#allocation3] sm:$0x1]
      %v120 = vsel %vm105, %v119, 0.0
      %121 = vadd.xlane.f32.xlu0 %v120
      %v122 = vpop.xlane.xlu0 %121
      %v123 = vrot.slane %v122, 4
      %v124 = vadd.f32 %v122, %v123
      %v125 = vrot.slane %v124, 2
      %v126 = vadd.f32 %v124, %v125
      %v127 = vrot.slane %v126, 1
      %v128 = vadd.f32 %v126, %v127
      %s129 = vtos %v128
      %v130 = vstv %s129
      %131 = vst.msk [vmem:[#allocation10] sm:$0x1] %vm117, %v130
    $region25: #{tpu_custom_call.1} parent=1 // pred_fallthru
      _
    // Predicated region
    $region26: #{tpu_custom_call.1} parent=1 // pred_check
      _
    $region27: #{tpu_custom_call.1} parent=1 // pred_check_branch
      %133 = sbr.rel (0) target = $region29
    $region28: #{tpu_custom_call.1} parent=1 // pred_region
      %135 = vsyncadd [#allocation6], 0
      %s137 = sshll.u32 [#allocation9], 4
      %s138 = int_to_ptr.vmem [resolvable:$true] %s137
      %s139 = sshll.u32 %s2, 4
      %s140 = int_to_ptr.hbm [resolvable:$true] %s139
      %142 = dma.vmem_to_hbm [thread:$0]  %s138, 16, %s140, [#allocation6]
    $region29: #{tpu_custom_call.1} parent=1 // pred_fallthru
      _
    // Predicated region
    $region30: #{tpu_custom_call.1} parent=1 // pred_check
      _
    $region31: #{tpu_custom_call.1} parent=1 // pred_check_branch
      %144 = sbr.rel (0) target = $region33
    $region32: #{tpu_custom_call.1} parent=1 // pred_region
      %146 = vsyncadd [#allocation11], 0
      %s148 = sshll.u32 [#allocation10], 4
      %s149 = int_to_ptr.vmem [resolvable:$true] %s148
      %s150 = sshll.u32 %s3, 4
      %s151 = int_to_ptr.hbm [resolvable:$true] %s150
      %153 = dma.vmem_to_hbm [thread:$0]  %s149, 16, %s151, [#allocation11]
    $region33: #{tpu_custom_call.1} parent=1 // pred_fallthru
      _
    // Predicated region
    $region34: #{tpu_custom_call.1} parent=1 // pred_check
      _
    $region35: #{tpu_custom_call.1} parent=1 // pred_check_branch
      %155 = sbr.rel (0) target = $region37
    $region36: #{tpu_custom_call.1} parent=1 // pred_region
      %157 = dma.done [#allocation6], 16
    $region37: #{tpu_custom_call.1} parent=1 // pred_fallthru
      _
    // Predicated region
    $region38: #{tpu_custom_call.1} parent=1 // pred_check
      _
    $region39: #{tpu_custom_call.1} parent=1 // pred_check_branch
      %159 = sbr.rel (0) target = $region41
    $region40: #{tpu_custom_call.1} parent=1 // pred_region
      %161 = dma.done [#allocation11], 16
    $region41: #{tpu_custom_call.1} parent=1 // pred_fallthru
      _
    %162 = vsyncpa [#allocation5], 1
    %163 = vsyncpa [#allocation8], 1
    %164 = vsyncpa [#allocation6], 1
    %165 = vsyncpa [#allocation11], 1

</llo_original>
